<compile_context>
chip_gen: v5e
topology: v5e:2x2
jax: 0.10.0
libtpu: 0.0.40
codegen_flags: <defaults>
</compile_context>

<pallas_src>
import jax
import jax.numpy as jnp
import numpy as np
from jax.experimental import pallas as pl
from jax.experimental.pallas import tpu as pltpu

N, C_IN, H, W = 2, 3, 16, 16
C_OUT = 8
NUM_CLASSES = 10
KH = KW = 3
LANE = 128                  # TPU lane width
ROW_IN = W * C_IN           # 48   flattened (w, c) per image row
ROW_OUT = W * C_OUT         # 128  flattened (w, o) per conv-output row (lane dense)


def _fused_kernel(x_ref, mean_ref, band_ref, bconv_ref, prow_ref, pcol_ref,
                  wfc_ref, bfc_ref, logits_ref, latent_ref, pad_ref):
    """Whole-batch fused forward: normalize -> 3x3 conv -> ReLU -> GAP -> FC."""
    n = x_ref.shape[0]

    # --- InputNormalize: clamp(x, 0, 1) - mean   (1/std is folded into band) ---
    xn = jnp.clip(x_ref[...], 0.0, 1.0) - mean_ref[...]            # (n, H, 128)

    # --- zero pad along H only (W padding is folded into the banded weights) ---
    pad_ref[...] = jnp.zeros_like(pad_ref)                         # once per call
    pad_ref[:, pl.ds(1, H), :] = xn                                # rows 1..H

    # --- lowered conv: one bf16 MXU matmul on lane-dense rows ----------------
    taps = [pad_ref[:, pl.ds(dy, H), :].reshape(n * H, LANE) for dy in range(KH)]
    patches = jnp.concatenate(taps, axis=-1).astype(jnp.bfloat16)  # (n*H, 3*128)
    conv = jnp.dot(patches, band_ref[...],
                   preferred_element_type=jnp.float32)             # (n*H, 128)
    act = jnp.maximum(conv + bconv_ref[...], 0.0)                  # ReLU

    # --- global average pool (two tiny matmuls) + final linear ---------------
    row_sums = jnp.dot(prow_ref[...], act,
                       preferred_element_type=jnp.float32)         # (n, 128)
    latent = jnp.dot(row_sums, pcol_ref[...],
                     preferred_element_type=jnp.float32)           # (n, C_OUT)
    logits = jnp.dot(latent, wfc_ref[...],
                     preferred_element_type=jnp.float32) + bfc_ref[...]  # (n, 128)

    logits_ref[...] = logits                                       # dense 128-lane store
    latent_ref[...] = latent


def _prepare_params(params):
    """Host-side weight preprocessing: fold 1/std into the conv weights, lower the
    3x3 'SAME' conv to a banded (384, 128) matrix, tile biases to lane-dense rows,
    build pooling matrices and lane-pad the FC weights.  Pure weight transforms."""
    wconv = np.asarray(params["wconv"], np.float32)                # (KH,KW,C_IN,C_OUT)
    std = np.asarray(params["std"], np.float32).reshape(C_IN)
    mean = np.asarray(params["mean"], np.float32).reshape(C_IN)
    w_fold = wconv / std[None, None, :, None]                      # fold 1/std (safe w/ zero pad)

    # Banded matrix:  conv[n*H+h, w*C_OUT+o] = sum_dy patches_dy @ band_dy,
    # patches_dy[n*H+h, 3*wi+c] = x_norm_padH[n, h+dy-1, wi, c].
    band = np.zeros((KH, LANE, ROW_OUT), np.float32)
    for dy in range(KH):
        for w_out in range(W):
            for dx in range(KW):
                wi = w_out + dx - 1
                if 0 <= wi < W:                                    # W zero-padding folded in
                    band[dy, C_IN * wi:C_IN * wi + C_IN,
                         C_OUT * w_out:C_OUT * (w_out + 1)] = w_fold[dy, dx]
    band = band.reshape(KH * LANE, ROW_OUT)                        # (384, 128)

    mean_t = np.zeros((1, 1, LANE), np.float32)
    mean_t[0, 0, :ROW_IN] = np.tile(mean, W)                       # lane 3*w+c -> mean[c]

    bconv_t = np.tile(np.asarray(params["bconv"], np.float32).reshape(C_OUT), W)
    bconv_t = bconv_t.reshape(1, ROW_OUT)                          # lane 8*w+o -> b[o]

    pool_rows = np.kron(np.eye(N, dtype=np.float32),
                        np.ones((1, H), np.float32))               # (N, N*H): sum over h
    pool_cols = np.tile(np.eye(C_OUT, dtype=np.float32), (W, 1)) / float(H * W)  # (128, C_OUT)

    wfc_pad = np.zeros((C_OUT, LANE), np.float32)
    wfc_pad[:, :NUM_CLASSES] = np.asarray(params["wfc"], np.float32)
    bfc_pad = np.zeros((1, LANE), np.float32)
    bfc_pad[0, :NUM_CLASSES] = np.asarray(params["bfc"], np.float32).reshape(-1)

    return dict(
        band=jnp.asarray(band, jnp.bfloat16),   # bf16 MXU operand, f32 accumulation
        mean=jnp.asarray(mean_t),
        bconv=jnp.asarray(bconv_t),
        pool_rows=jnp.asarray(pool_rows),
        pool_cols=jnp.asarray(pool_cols),
        wfc=jnp.asarray(wfc_pad),
        bfc=jnp.asarray(bfc_pad),
    )


def _run_pallas(x_pad, prep):
    n = x_pad.shape[0]
    grid_spec = pltpu.PrefetchScalarGridSpec(
        num_scalar_prefetch=0,
        grid=(1,),                                # single invocation: whole batch in VMEM
        in_specs=[
            pl.BlockSpec((n, H, LANE), lambda i: (0, 0, 0)),        # x, lane padded
            pl.BlockSpec((1, 1, LANE), lambda i: (0, 0, 0)),        # mean (tiled, lane padded)
            pl.BlockSpec((KH * LANE, ROW_OUT), lambda i: (0, 0)),   # banded conv weights (bf16)
            pl.BlockSpec((1, ROW_OUT), lambda i: (0, 0)),           # conv bias (tiled)
            pl.BlockSpec((n, n * H), lambda i: (0, 0)),             # row-pool matrix
            pl.BlockSpec((ROW_OUT, C_OUT), lambda i: (0, 0)),       # col-pool matrix (/ H*W)
            pl.BlockSpec((C_OUT, LANE), lambda i: (0, 0)),          # fc weight, lane padded
            pl.BlockSpec((1, LANE), lambda i: (0, 0)),              # fc bias, lane padded
        ],
        out_specs=[
            pl.BlockSpec((n, LANE), lambda i: (0, 0)),              # logits (lane dense)
            pl.BlockSpec((n, C_OUT), lambda i: (0, 0)),             # latent (single store)
        ],
        scratch_shapes=[pltpu.VMEM((n, H + 2, LANE), jnp.float32)],  # H-padded image
    )
    logits_pad, latent = pl.pallas_call(
        _fused_kernel,
        out_shape=(jax.ShapeDtypeStruct((n, LANE), jnp.float32),
                   jax.ShapeDtypeStruct((n, C_OUT), jnp.float32)),
        grid_spec=grid_spec,
        compiler_params=pltpu.CompilerParams(dimension_semantics=("arbitrary",)),
    )(x_pad, prep["mean"], prep["band"], prep["bconv"], prep["pool_rows"],
      prep["pool_cols"], prep["wfc"], prep["bfc"])
    return logits_pad[:, :NUM_CLASSES], latent


def model_with_input_normalization(inp_nchw, params, with_latent=False,
                                    fake_relu=False, no_relu=False):
    """Mirrors ModelwithInputNormalization.forward (inp is NCHW, PyTorch style)."""
    if no_relu and (not with_latent):
        print("WARNING: 'no_relu' has no visible effect if 'with_latent is False.")
    if no_relu and fake_relu:
        raise ValueError("Options 'no_relu' and 'fake_relu' are exclusive")
    # TODO(synk): fake_relu / no_relu only alter the backward pass / latent
    # activation of the original injected net; forward logits are unchanged.

    prep = _prepare_params(params)
    n = inp_nchw.shape[0]
    # Layout plumbing only: NCHW -> NHWC -> (n, H, W*C), lane-padded to 128.
    x = jnp.transpose(inp_nchw, (0, 2, 3, 1)).astype(jnp.float32)
    x = x.reshape(n, H, ROW_IN)
    x = jnp.pad(x, ((0, 0), (0, 0), (0, LANE - ROW_IN)))
    logits, latent = _run_pallas(x, prep)
    if with_latent:
        return logits, latent
    return logits


def init_params(key=None):
    if key is None:
        key = jax.random.PRNGKey(0)
    k1, k2, k3, k4 = jax.random.split(key, 4)
    mean = jnp.array([0.485, 0.456, 0.406], jnp.float32).reshape(1, 1, C_IN)
    std = jnp.array([0.229, 0.224, 0.225], jnp.float32).reshape(1, 1, C_IN)
    return dict(
        mean=mean,
        std=std,
        wconv=0.1 * jax.random.normal(k1, (KH, KW, C_IN, C_OUT), jnp.float32),
        bconv=0.1 * jax.random.normal(k2, (1, C_OUT), jnp.float32),
        wfc=0.1 * jax.random.normal(k3, (C_OUT, NUM_CLASSES), jnp.float32),
        bfc=0.1 * jax.random.normal(k4, (1, NUM_CLASSES), jnp.float32),
    )


def _reference(inp_nchw, params):
    """Pure-JAX reference of the same forward (sanity check)."""
    x = jnp.transpose(inp_nchw, (0, 2, 3, 1)).astype(jnp.float32)   # NHWC
    xn = (jnp.clip(x, 0.0, 1.0) - params["mean"][None]) / params["std"][None]
    y = jax.lax.conv_general_dilated(
        xn, params["wconv"], window_strides=(1, 1), padding="SAME",
        dimension_numbers=("NHWC", "HWIO", "NHWC"))
    y = y + params["bconv"].reshape(1, 1, 1, C_OUT)
    y = jnp.maximum(y, 0.0)
    latent = jnp.mean(y, axis=(1, 2))                               # (N, C_OUT)
    return latent @ params["wfc"] + params["bfc"], latent


if __name__ == "__main__":
    root = jax.random.PRNGKey(0)
    k_params, k_x = jax.random.split(root)
    params = init_params(k_params)
    x = jax.random.uniform(k_x, (N, C_IN, H, W), jnp.float32,
                           minval=-0.1, maxval=1.1)   # exercises the clamp

    logits = model_with_input_normalization(x, params)
    logits, latent = model_with_input_normalization(x, params, with_latent=True)
    jax.block_until_ready((logits, latent))

    ref_logits, ref_latent = _reference(x, params)
    assert logits.shape == (N, NUM_CLASSES) and latent.shape == (N, C_OUT)
    assert jnp.allclose(logits, ref_logits, rtol=1e-2, atol=1e-2)
    assert jnp.allclose(latent, ref_latent, rtol=1e-2, atol=1e-2)

    print("KERNEL_OK")
</pallas_src>

<mosaic_0001>
module attributes {stable_mosaic.version = 11 : i64} {
  func.func @_fused_kernel(%arg0: i32, %arg1: memref<2x16x128xf32, #tpu.memory_space<vmem>>, %arg2: memref<1x1x128xf32, #tpu.memory_space<vmem>>, %arg3: memref<384x128xbf16, #tpu.memory_space<vmem>>, %arg4: memref<1x128xf32, #tpu.memory_space<vmem>>, %arg5: memref<2x32xf32, #tpu.memory_space<vmem>>, %arg6: memref<128x8xf32, #tpu.memory_space<vmem>>, %arg7: memref<8x128xf32, #tpu.memory_space<vmem>>, %arg8: memref<1x128xf32, #tpu.memory_space<vmem>>, %arg9: memref<2x128xf32, #tpu.memory_space<vmem>>, %arg10: memref<2x8xf32, #tpu.memory_space<vmem>>, %arg11: memref<2x18x128xf32, #tpu.memory_space<vmem>>) attributes {dimension_semantics = [#tpu.dimension_semantics<arbitrary>], iteration_bounds = array<i64: 1>, scalar_prefetch = 0 : i64, scratch_operands = 1 : i64, tpu.core_type = #tpu.core_type<tc>, window_params = [{pipeline_mode = #tpu.pipeline_mode<synchronous>, transform_indices = @transform_0, window_bounds = array<i64: 2, 16, 128>}, {pipeline_mode = #tpu.pipeline_mode<synchronous>, transform_indices = @transform_1, window_bounds = array<i64: 1, 1, 128>}, {pipeline_mode = #tpu.pipeline_mode<synchronous>, transform_indices = @transform_2, window_bounds = array<i64: 384, 128>}, {pipeline_mode = #tpu.pipeline_mode<synchronous>, transform_indices = @transform_3, window_bounds = array<i64: 1, 128>}, {pipeline_mode = #tpu.pipeline_mode<synchronous>, transform_indices = @transform_4, window_bounds = array<i64: 2, 32>}, {pipeline_mode = #tpu.pipeline_mode<synchronous>, transform_indices = @transform_5, window_bounds = array<i64: 128, 8>}, {pipeline_mode = #tpu.pipeline_mode<synchronous>, transform_indices = @transform_6, window_bounds = array<i64: 8, 128>}, {pipeline_mode = #tpu.pipeline_mode<synchronous>, transform_indices = @transform_7, window_bounds = array<i64: 1, 128>}, {pipeline_mode = #tpu.pipeline_mode<synchronous>, transform_indices = @transform_8, window_bounds = array<i64: 2, 128>}, {pipeline_mode = #tpu.pipeline_mode<synchronous>, transform_indices = @transform_9, window_bounds = array<i64: 2, 8>}]} {
    %c0 = arith.constant 0 : index
    %c0_0 = arith.constant 0 : index
    %c0_1 = arith.constant 0 : index
    %0 = vector.load %arg1[%c0, %c0_0, %c0_1] : memref<2x16x128xf32, #tpu.memory_space<vmem>>, vector<2x16x128xf32>
    %cst = arith.constant 0.000000e+00 : f32
    %cst_2 = arith.constant 1.000000e+00 : f32
    %1 = vector.broadcast %cst : f32 to vector<2x16x128xf32>
    %2 = arith.maximumf %1, %0 : vector<2x16x128xf32>
    %3 = vector.broadcast %cst_2 : f32 to vector<2x16x128xf32>
    %4 = arith.minimumf %3, %2 : vector<2x16x128xf32>
    %c0_3 = arith.constant 0 : index
    %c0_4 = arith.constant 0 : index
    %c0_5 = arith.constant 0 : index
    %5 = vector.load %arg2[%c0_3, %c0_4, %c0_5] : memref<1x1x128xf32, #tpu.memory_space<vmem>>, vector<1x1x128xf32>
    %6 = vector.broadcast %5 : vector<1x1x128xf32> to vector<2x16x128xf32>
    %7 = arith.subf %4, %6 : vector<2x16x128xf32>
    %cst_6 = arith.constant 0.000000e+00 : f32
    %8 = vector.broadcast %cst_6 : f32 to vector<2x18x128xf32>
    %c0_7 = arith.constant 0 : index
    %c0_8 = arith.constant 0 : index
    %c0_9 = arith.constant 0 : index
    %9 = vector.load %arg11[%c0_7, %c0_8, %c0_9] : memref<2x18x128xf32, #tpu.memory_space<vmem>>, vector<2x18x128xf32>
    tpu.vector_store %arg11[%c0_7, %c0_8, %c0_9], %8 {strides = array<i32>} : memref<2x18x128xf32, #tpu.memory_space<vmem>>, vector<2x18x128xf32>,
    %c0_10 = arith.constant 0 : index
    %c1 = arith.constant 1 : index
    %c0_11 = arith.constant 0 : index
    %10 = vector.load %arg11[%c0_10, %c1, %c0_11] : memref<2x18x128xf32, #tpu.memory_space<vmem>>, vector<2x16x128xf32>
    tpu.vector_store %arg11[%c0_10, %c1, %c0_11], %7 {strides = array<i32>} : memref<2x18x128xf32, #tpu.memory_space<vmem>>, vector<2x16x128xf32>,
    %c0_12 = arith.constant 0 : index
    %c0_13 = arith.constant 0 : index
    %c0_14 = arith.constant 0 : index
    %11 = vector.load %arg11[%c0_12, %c0_13, %c0_14] : memref<2x18x128xf32, #tpu.memory_space<vmem>>, vector<2x16x128xf32>
    %12 = vector.shape_cast %11 : vector<2x16x128xf32> to vector<32x128xf32>
    %c0_15 = arith.constant 0 : index
    %c1_16 = arith.constant 1 : index
    %c0_17 = arith.constant 0 : index
    %13 = vector.load %arg11[%c0_15, %c1_16, %c0_17] : memref<2x18x128xf32, #tpu.memory_space<vmem>>, vector<2x16x128xf32>
    %14 = vector.shape_cast %13 : vector<2x16x128xf32> to vector<32x128xf32>
    %c0_18 = arith.constant 0 : index
    %c2 = arith.constant 2 : index
    %c0_19 = arith.constant 0 : index
    %15 = vector.load %arg11[%c0_18, %c2, %c0_19] : memref<2x18x128xf32, #tpu.memory_space<vmem>>, vector<2x16x128xf32>
    %16 = vector.shape_cast %15 : vector<2x16x128xf32> to vector<32x128xf32>
    %17 = tpu.concatenate %12, %14, %16 in 1 : vector<32x128xf32>, vector<32x128xf32>, vector<32x128xf32> -> vector<32x384xf32>
    %18 = arith.truncf %17 : vector<32x384xf32> to vector<32x384xbf16>
    %c0_20 = arith.constant 0 : index
    %c0_21 = arith.constant 0 : index
    %19 = vector.load %arg3[%c0_20, %c0_21] : memref<384x128xbf16, #tpu.memory_space<vmem>>, vector<384x128xbf16>
    %cst_22 = arith.constant dense<0.000000e+00> : vector<32x128xf32>
    %20 = tpu.matmul %18, %19, %cst_22 {dimension_numbers = #tpu.dot_dimension_numbers<[1], [0], [0], [1], [0, 0, 1, 1], [], []>} : vector<32x384xbf16>, vector<384x128xbf16>, vector<32x128xf32> -> vector<32x128xf32>
    %c0_23 = arith.constant 0 : index
    %c0_24 = arith.constant 0 : index
    %21 = vector.load %arg4[%c0_23, %c0_24] : memref<1x128xf32, #tpu.memory_space<vmem>>, vector<1x128xf32>
    %22 = vector.broadcast %21 : vector<1x128xf32> to vector<32x128xf32>
    %23 = arith.addf %20, %22 : vector<32x128xf32>
    %cst_25 = arith.constant 0.000000e+00 : f32
    %24 = vector.broadcast %cst_25 : f32 to vector<32x128xf32>
    %25 = arith.maximumf %23, %24 : vector<32x128xf32>
    %c0_26 = arith.constant 0 : index
    %c0_27 = arith.constant 0 : index
    %26 = vector.load %arg5[%c0_26, %c0_27] : memref<2x32xf32, #tpu.memory_space<vmem>>, vector<2x32xf32>
    %cst_28 = arith.constant dense<0.000000e+00> : vector<2x128xf32>
    %27 = tpu.matmul %26, %25, %cst_28 {dimension_numbers = #tpu.dot_dimension_numbers<[1], [0], [0], [1], [0, 0, 1, 1], [], []>} : vector<2x32xf32>, vector<32x128xf32>, vector<2x128xf32> -> vector<2x128xf32>
    %c0_29 = arith.constant 0 : index
    %c0_30 = arith.constant 0 : index
    %28 = vector.load %arg6[%c0_29, %c0_30] : memref<128x8xf32, #tpu.memory_space<vmem>>, vector<128x8xf32>
    %cst_31 = arith.constant dense<0.000000e+00> : vector<2x8xf32>
    %29 = tpu.matmul %27, %28, %cst_31 {dimension_numbers = #tpu.dot_dimension_numbers<[1], [0], [0], [1], [0, 0, 1, 1], [], []>} : vector<2x128xf32>, vector<128x8xf32>, vector<2x8xf32> -> vector<2x8xf32>
    %c0_32 = arith.constant 0 : index
    %c0_33 = arith.constant 0 : index
    %30 = vector.load %arg7[%c0_32, %c0_33] : memref<8x128xf32, #tpu.memory_space<vmem>>, vector<8x128xf32>
    %cst_34 = arith.constant dense<0.000000e+00> : vector<2x128xf32>
    %31 = tpu.matmul %29, %30, %cst_34 {dimension_numbers = #tpu.dot_dimension_numbers<[1], [0], [0], [1], [0, 0, 1, 1], [], []>} : vector<2x8xf32>, vector<8x128xf32>, vector<2x128xf32> -> vector<2x128xf32>
    %c0_35 = arith.constant 0 : index
    %c0_36 = arith.constant 0 : index
    %32 = vector.load %arg8[%c0_35, %c0_36] : memref<1x128xf32, #tpu.memory_space<vmem>>, vector<1x128xf32>
    %33 = vector.broadcast %32 : vector<1x128xf32> to vector<2x128xf32>
    %34 = arith.addf %31, %33 : vector<2x128xf32>
    %c0_37 = arith.constant 0 : index
    %c0_38 = arith.constant 0 : index
    %35 = vector.load %arg9[%c0_37, %c0_38] : memref<2x128xf32, #tpu.memory_space<vmem>>, vector<2x128xf32>
    tpu.vector_store %arg9[%c0_37, %c0_38], %34 {strides = array<i32>} : memref<2x128xf32, #tpu.memory_space<vmem>>, vector<2x128xf32>,
    %c0_39 = arith.constant 0 : index
    %c0_40 = arith.constant 0 : index
    %36 = vector.load %arg10[%c0_39, %c0_40] : memref<2x8xf32, #tpu.memory_space<vmem>>, vector<2x8xf32>
    tpu.vector_store %arg10[%c0_39, %c0_40], %29 {strides = array<i32>} : memref<2x8xf32, #tpu.memory_space<vmem>>, vector<2x8xf32>,
    return
  }
  func.func @transform_0(%arg0: i32) -> (i32, i32, i32) {
    %c0_i32 = arith.constant 0 : i32
    %c0_i32_0 = arith.constant 0 : i32
    %c0_i32_1 = arith.constant 0 : i32
    %c0_i32_2 = arith.constant 0 : i32
    return %c0_i32, %c0_i32_0, %c0_i32_1 : i32, i32, i32
  }
  func.func @transform_1(%arg0: i32) -> (i32, i32, i32) {
    %c0_i32 = arith.constant 0 : i32
    %c0_i32_0 = arith.constant 0 : i32
    %c0_i32_1 = arith.constant 0 : i32
    %c0_i32_2 = arith.constant 0 : i32
    return %c0_i32, %c0_i32_0, %c0_i32_1 : i32, i32, i32
  }
  func.func @transform_2(%arg0: i32) -> (i32, i32) {
    %c0_i32 = arith.constant 0 : i32
    %c0_i32_0 = arith.constant 0 : i32
    %c0_i32_1 = arith.constant 0 : i32
    return %c0_i32, %c0_i32_0 : i32, i32
  }
  func.func @transform_3(%arg0: i32) -> (i32, i32) {
    %c0_i32 = arith.constant 0 : i32
    %c0_i32_0 = arith.constant 0 : i32
    %c0_i32_1 = arith.constant 0 : i32
    return %c0_i32, %c0_i32_0 : i32, i32
  }
  func.func @transform_4(%arg0: i32) -> (i32, i32) {
    %c0_i32 = arith.constant 0 : i32
    %c0_i32_0 = arith.constant 0 : i32
    %c0_i32_1 = arith.constant 0 : i32
    return %c0_i32, %c0_i32_0 : i32, i32
  }
  func.func @transform_5(%arg0: i32) -> (i32, i32) {
    %c0_i32 = arith.constant 0 : i32
    %c0_i32_0 = arith.constant 0 : i32
    %c0_i32_1 = arith.constant 0 : i32
    return %c0_i32, %c0_i32_0 : i32, i32
  }
  func.func @transform_6(%arg0: i32) -> (i32, i32) {
    %c0_i32 = arith.constant 0 : i32
    %c0_i32_0 = arith.constant 0 : i32
    %c0_i32_1 = arith.constant 0 : i32
    return %c0_i32, %c0_i32_0 : i32, i32
  }
  func.func @transform_7(%arg0: i32) -> (i32, i32) {
    %c0_i32 = arith.constant 0 : i32
    %c0_i32_0 = arith.constant 0 : i32
    %c0_i32_1 = arith.constant 0 : i32
    return %c0_i32, %c0_i32_0 : i32, i32
  }
  func.func @transform_8(%arg0: i32) -> (i32, i32) {
    %c0_i32 = arith.constant 0 : i32
    %c0_i32_0 = arith.constant 0 : i32
    %c0_i32_1 = arith.constant 0 : i32
    return %c0_i32, %c0_i32_0 : i32, i32
  }
  func.func @transform_9(%arg0: i32) -> (i32, i32) {
    %c0_i32 = arith.constant 0 : i32
    %c0_i32_0 = arith.constant 0 : i32
    %c0_i32_1 = arith.constant 0 : i32
    return %c0_i32, %c0_i32_0 : i32, i32
  }
}

</mosaic_0001>

<llo_original>
// kernel: tpu_custom_call.1
$region0: #{tpu_custom_call.1}
  #allocation0 [shape = 'u32[]', space=smem, size = 0x4, offset = 0x4, fixed_abs, tag = 'smem constant byte address 0x4 - core index']
  #allocation1 [shape = 'u32[72,128]{1,0:T(1,128)}', space=vmem, size = 0x9000, scoped, tag = 'internal scratch']
  #allocation2 [shape = 'f32[2,18,128]{2,1,0:T(8,128)}', space=vmem, size = 0x6000, scoped, tag = 'scratch operand']
  %s0 = inlined_call_operand.vmem [shape: f32[2,16,128], index: 0, kind: input, shape index: {}]
  %s1 = inlined_call_operand.vmem [shape: f32[1,1,128], index: 1, kind: input, shape index: {}]
  %s2 = inlined_call_operand.hbm [shape: bf16[384,128], index: 2, kind: input, shape index: {}]
  %s3 = inlined_call_operand.vmem [shape: f32[1,128], index: 3, kind: input, shape index: {}]
  %s4 = inlined_call_operand.vmem [shape: f32[2,32], index: 4, kind: input, shape index: {}]
  %s5 = inlined_call_operand.vmem [shape: f32[128,8], index: 5, kind: input, shape index: {}]
  %s6 = inlined_call_operand.vmem [shape: f32[8,128], index: 6, kind: input, shape index: {}]
  %s7 = inlined_call_operand.vmem [shape: f32[1,128], index: 7, kind: input, shape index: {}]
  %s8 = inlined_call_operand.hbm [shape: f32[2,128], index: 8, kind: output, shape index: {0}]
  %s9 = inlined_call_operand.hbm [shape: f32[2,8], index: 9, kind: output, shape index: {1}]
  %10 = xla_tuple %s8, %s9
  %s11 = sld [smem:[#allocation0]]
  $region54: #{tpu_custom_call.1} parent=0
    _
  %s13 = ssub.s32 1, %s11
  %s14 = scalar_select 0, %s13, %s11
  $region1: #{tpu_custom_call.1} parent=0
    #allocation3 [shape = 'u8[98304]{0}', space=vmem, size = 0x18000, scoped, tag = 'input window, operand 2, single buffered']
    #allocation4 [shape = 's32[1]{0}', space=sflag, size = 0x4, scoped, tag = 'scoped memory for tpu_custom_call.1']
    #allocation5 [shape = 's32[1]{0}', space=sflag, size = 0x4, scoped, tag = 'scoped memory for tpu_custom_call.1']
    #allocation6 [shape = 'u8[1024]{0}', space=vmem, size = 0x400, scoped, tag = 'output window, operand 0, single buffered']
    #allocation7 [shape = 'u8[1024]{0}', space=vmem, size = 0x400, scoped, tag = 'output window, operand 1, single buffered']
    #allocation8 [shape = 's32[1]{0}', space=sflag, size = 0x4, scoped, tag = 'scoped memory for tpu_custom_call.1']
    %15 = vsyncpa [#allocation4], 0
    %16 = vsyncpa [#allocation5], 0
    %17 = vsyncpa [#allocation8], 0
    // Predicated region
    $region2: #{tpu_custom_call.1} parent=1 // pred_check
      _
    $region3: #{tpu_custom_call.1} parent=1 // pred_check_branch
      %19 = sbr.rel (0) target = $region5
    $region4: #{tpu_custom_call.1} parent=1 // pred_region
      _
    $region5: #{tpu_custom_call.1} parent=1 // pred_fallthru
      _
    // Predicated region
    $region6: #{tpu_custom_call.1} parent=1 // pred_check
      _
    $region7: #{tpu_custom_call.1} parent=1 // pred_check_branch
      %21 = sbr.rel (0) target = $region9
    $region8: #{tpu_custom_call.1} parent=1 // pred_region
      _
    $region9: #{tpu_custom_call.1} parent=1 // pred_fallthru
      _
    // Predicated region
    $region10: #{tpu_custom_call.1} parent=1 // pred_check
      _
    $region11: #{tpu_custom_call.1} parent=1 // pred_check_branch
      %23 = sbr.rel (0) target = $region13
    $region12: #{tpu_custom_call.1} parent=1 // pred_region
      %25 = vsyncadd [#allocation4], 0
      %s26 = sshll.u32 %s2, 4
      %s27 = int_to_ptr.hbm [resolvable:$true] %s26
      %s28 = sshll.u32 [#allocation3], 4
      %s29 = int_to_ptr.vmem [resolvable:$true] %s28
      %34 = dma.hbm_to_vmem [thread:$0]  %s27, 3072, %s29, [#allocation4], 64, 64, 4
    $region13: #{tpu_custom_call.1} parent=1 // pred_fallthru
      _
    // Predicated region
    $region14: #{tpu_custom_call.1} parent=1 // pred_check
      _
    $region15: #{tpu_custom_call.1} parent=1 // pred_check_branch
      %36 = sbr.rel (0) target = $region17
    $region16: #{tpu_custom_call.1} parent=1 // pred_region
      _
    $region17: #{tpu_custom_call.1} parent=1 // pred_fallthru
      _
    // Predicated region
    $region18: #{tpu_custom_call.1} parent=1 // pred_check
      _
    $region19: #{tpu_custom_call.1} parent=1 // pred_check_branch
      %38 = sbr.rel (0) target = $region21
    $region20: #{tpu_custom_call.1} parent=1 // pred_region
      _
    $region21: #{tpu_custom_call.1} parent=1 // pred_fallthru
      _
    // Predicated region
    $region22: #{tpu_custom_call.1} parent=1 // pred_check
      _
    $region23: #{tpu_custom_call.1} parent=1 // pred_check_branch
      %40 = sbr.rel (0) target = $region25
    $region24: #{tpu_custom_call.1} parent=1 // pred_region
      _
    $region25: #{tpu_custom_call.1} parent=1 // pred_fallthru
      _
    // Predicated region
    $region26: #{tpu_custom_call.1} parent=1 // pred_check
      _
    $region27: #{tpu_custom_call.1} parent=1 // pred_check_branch
      %42 = sbr.rel (0) target = $region29
    $region28: #{tpu_custom_call.1} parent=1 // pred_region
      _
    $region29: #{tpu_custom_call.1} parent=1 // pred_fallthru
      _
    // Predicated region
    $region30: #{tpu_custom_call.1} parent=1 // pred_check
      _
    $region31: #{tpu_custom_call.1} parent=1 // pred_check_branch
      %44 = sbr.rel (0) target = $region33
    $region32: #{tpu_custom_call.1} parent=1 // pred_region
      _
    $region33: #{tpu_custom_call.1} parent=1 // pred_fallthru
      _
    // Predicated region
    $region34: #{tpu_custom_call.1} parent=1 // pred_check
      _
    $region35: #{tpu_custom_call.1} parent=1 // pred_check_branch
      %46 = sbr.rel (0) target = $region37
    $region36: #{tpu_custom_call.1} parent=1 // pred_region
      %48 = dma.done [#allocation4], 3072
    $region37: #{tpu_custom_call.1} parent=1 // pred_fallthru
      _
    %v49 = vld [vmem:[%s0] sm:$0xff]
    %v50 = vld [vmem:[%s0 + $0x8] sm:$0xff]
    %v51 = vld [vmem:[%s0 + $0x10] sm:$0xff]
    %v52 = vld [vmem:[%s0 + $0x18] sm:$0xff]
    %v53 = vmax.f32 %v49, 0.0
    %v54 = vmax.f32 %v50, 0.0
    %v55 = vmax.f32 %v51, 0.0
    %v56 = vmax.f32 %v52, 0.0
    %v57 = vmin.f32 %v53, 1.0
    %v58 = vmin.f32 %v54, 1.0
    %v59 = vmin.f32 %v55, 1.0
    %v60 = vmin.f32 %v56, 1.0
    %v61 = vld [vmem:[%s1] sm:$0x1]
    %v63 = vperm.slane %v61, 0
    %v65 = vsub.f32 %v57, %v63
    %v66 = vsub.f32 %v58, %v63
    %v67 = vsub.f32 %v59, %v63
    %v68 = vsub.f32 %v60, %v63
    %69 = vst [vmem:[#allocation2] sm:$0xff] 0.0
    %70 = vst [vmem:[#allocation2 + $0x8] sm:$0xff] 0.0
    %71 = vst [vmem:[#allocation2 + $0x10] sm:$0x3] 0.0
    %72 = vst [vmem:[#allocation2 + $0x18] sm:$0xff] 0.0
    %73 = vst [vmem:[#allocation2 + $0x20] sm:$0xff] 0.0
    %74 = vst [vmem:[#allocation2 + $0x28] sm:$0x3] 0.0
    %75 = vst [vmem:[#allocation2 + $0x1] sm:$0xff] %v65
    %76 = vst [vmem:[#allocation2 + $0x9] sm:$0xff] %v66
    %77 = vst [vmem:[#allocation2 + $0x19] sm:$0xff] %v67
    %78 = vst [vmem:[#allocation2 + $0x21] sm:$0xff] %v68
    %v79 = vld [vmem:[#allocation2] sm:$0xff]
    %v80 = vld [vmem:[#allocation2 + $0x8] sm:$0xff]
    %v81 = vld [vmem:[#allocation2 + $0x18] sm:$0xff]
    %v82 = vld [vmem:[#allocation2 + $0x20] sm:$0xff]
    %v83 = vld [vmem:[#allocation2 + $0x1] sm:$0xff]
    %v84 = vld [vmem:[#allocation2 + $0x9] sm:$0xff]
    %v85 = vld [vmem:[#allocation2 + $0x19] sm:$0xff]
    %v86 = vld [vmem:[#allocation2 + $0x21] sm:$0xff]
    %v87 = vld [vmem:[#allocation2 + $0x2] sm:$0xff]
    %v88 = vld [vmem:[#allocation2 + $0xa] sm:$0xff]
    %v89 = vld [vmem:[#allocation2 + $0x1a] sm:$0xff]
    %v90 = vld [vmem:[#allocation2 + $0x22] sm:$0xff]
    %v91 = vpack.c.bf16 %v80, %v79
    %v92 = vpack.c.bf16 %v84, %v83
    %v93 = vpack.c.bf16 %v88, %v87
    %v94 = vpack.c.bf16 %v82, %v81
    %v95 = vpack.c.bf16 %v86, %v85
    %v96 = vpack.c.bf16 %v90, %v89
    %v97 = vld [vmem:[#allocation3] sm:$0xf]
    %v98 = vld [vmem:[#allocation3 + $0x4] sm:$0xf]
    %v99 = vld [vmem:[#allocation3 + $0x8] sm:$0xf]
    %v100 = vld [vmem:[#allocation3 + $0xc] sm:$0xf]
    %v101 = vld [vmem:[#allocation3 + $0x10] sm:$0xf]
    %v102 = vld [vmem:[#allocation3 + $0x14] sm:$0xf]
    %v103 = vld [vmem:[#allocation3 + $0x18] sm:$0xf]
    %v104 = vld [vmem:[#allocation3 + $0x1c] sm:$0xf]
    %v105 = vld [vmem:[#allocation3 + $0x20] sm:$0xf]
    %v106 = vld [vmem:[#allocation3 + $0x24] sm:$0xf]
    %v107 = vld [vmem:[#allocation3 + $0x28] sm:$0xf]
    %v108 = vld [vmem:[#allocation3 + $0x2c] sm:$0xf]
    %v109 = vld [vmem:[#allocation3 + $0x30] sm:$0xf]
    %v110 = vld [vmem:[#allocation3 + $0x34] sm:$0xf]
    %v111 = vld [vmem:[#allocation3 + $0x38] sm:$0xf]
    %v112 = vld [vmem:[#allocation3 + $0x3c] sm:$0xf]
    %v113 = vld [vmem:[#allocation3 + $0x40] sm:$0xf]
    %v114 = vld [vmem:[#allocation3 + $0x44] sm:$0xf]
    %v115 = vld [vmem:[#allocation3 + $0x48] sm:$0xf]
    %v116 = vld [vmem:[#allocation3 + $0x4c] sm:$0xf]
    %v117 = vld [vmem:[#allocation3 + $0x50] sm:$0xf]
    %v118 = vld [vmem:[#allocation3 + $0x54] sm:$0xf]
    %v119 = vld [vmem:[#allocation3 + $0x58] sm:$0xf]
    %v120 = vld [vmem:[#allocation3 + $0x5c] sm:$0xf]
    %v121 = vld [vmem:[#allocation3 + $0x60] sm:$0xf]
    %v122 = vld [vmem:[#allocation3 + $0x64] sm:$0xf]
    %v123 = vld [vmem:[#allocation3 + $0x68] sm:$0xf]
    %v124 = vld [vmem:[#allocation3 + $0x6c] sm:$0xf]
    %v125 = vld [vmem:[#allocation3 + $0x70] sm:$0xf]
    %v126 = vld [vmem:[#allocation3 + $0x74] sm:$0xf]
    %v127 = vld [vmem:[#allocation3 + $0x78] sm:$0xf]
    %v128 = vld [vmem:[#allocation3 + $0x7c] sm:$0xf]
    %v129 = vld [vmem:[#allocation3 + $0x80] sm:$0xf]
    %v130 = vld [vmem:[#allocation3 + $0x84] sm:$0xf]
    %v131 = vld [vmem:[#allocation3 + $0x88] sm:$0xf]
    %v132 = vld [vmem:[#allocation3 + $0x8c] sm:$0xf]
    %v133 = vld [vmem:[#allocation3 + $0x90] sm:$0xf]
    %v134 = vld [vmem:[#allocation3 + $0x94] sm:$0xf]
    %v135 = vld [vmem:[#allocation3 + $0x98] sm:$0xf]
    %v136 = vld [vmem:[#allocation3 + $0x9c] sm:$0xf]
    %v137 = vld [vmem:[#allocation3 + $0xa0] sm:$0xf]
    %v138 = vld [vmem:[#allocation3 + $0xa4] sm:$0xf]
    %v139 = vld [vmem:[#allocation3 + $0xa8] sm:$0xf]
    %v140 = vld [vmem:[#allocation3 + $0xac] sm:$0xf]
    %v141 = vld [vmem:[#allocation3 + $0xb0] sm:$0xf]
    %v142 = vld [vmem:[#allocation3 + $0xb4] sm:$0xf]
    %v143 = vld [vmem:[#allocation3 + $0xb8] sm:$0xf]
    %v144 = vld [vmem:[#allocation3 + $0xbc] sm:$0xf]
    %v145 = vld [vmem:[%s3] sm:$0x1]
    %v147 = vperm.slane %v145, 0
    %v197 = vunpack.c.l.b16 %v97
    %v198 = vunpack.c.l.b16 %v98
    %v199 = vunpack.c.l.b16 %v99
    %v200 = vunpack.c.l.b16 %v100
    %v201 = vunpack.c.l.b16 %v101
    %v202 = vunpack.c.l.b16 %v102
    %v203 = vunpack.c.l.b16 %v103
    %v204 = vunpack.c.l.b16 %v104
    %v205 = vunpack.c.l.b16 %v105
    %v206 = vunpack.c.l.b16 %v106
    %v207 = vunpack.c.l.b16 %v107
    %v208 = vunpack.c.l.b16 %v108
    %v209 = vunpack.c.l.b16 %v109
    %v210 = vunpack.c.l.b16 %v110
    %v211 = vunpack.c.l.b16 %v111
    %v212 = vunpack.c.l.b16 %v112
    %v213 = vunpack.c.l.b16 %v113
    %v214 = vunpack.c.l.b16 %v114
    %v215 = vunpack.c.l.b16 %v115
    %v216 = vunpack.c.l.b16 %v116
    %v217 = vunpack.c.l.b16 %v117
    %v218 = vunpack.c.l.b16 %v118
    %v219 = vunpack.c.l.b16 %v119
    %v220 = vunpack.c.l.b16 %v120
    %v221 = vunpack.c.l.b16 %v121
    %v222 = vunpack.c.l.b16 %v122
    %v223 = vunpack.c.l.b16 %v123
    %v224 = vunpack.c.l.b16 %v124
    %v225 = vunpack.c.l.b16 %v125
    %v226 = vunpack.c.l.b16 %v126
    %v227 = vunpack.c.l.b16 %v127
    %v228 = vunpack.c.l.b16 %v128
    %v229 = vunpack.c.l.b16 %v129
    %v230 = vunpack.c.l.b16 %v130
    %v231 = vunpack.c.l.b16 %v131
    %v232 = vunpack.c.l.b16 %v132
    %v233 = vunpack.c.l.b16 %v133
    %v234 = vunpack.c.l.b16 %v134
    %v235 = vunpack.c.l.b16 %v135
    %v236 = vunpack.c.l.b16 %v136
    %v237 = vunpack.c.l.b16 %v137
    %v238 = vunpack.c.l.b16 %v138
    %v239 = vunpack.c.l.b16 %v139
    %v240 = vunpack.c.l.b16 %v140
    %v241 = vunpack.c.l.b16 %v141
    %v242 = vunpack.c.l.b16 %v142
    %v243 = vunpack.c.l.b16 %v143
    %v244 = vunpack.c.l.b16 %v144
    %v245 = vpack.c.b16 %v198, %v197
    %v246 = vpack.c.b16 %v200, %v199
    %v247 = vpack.c.b16 %v202, %v201
    %v248 = vpack.c.b16 %v204, %v203
    %v249 = vpack.c.b16 %v206, %v205
    %v250 = vpack.c.b16 %v208, %v207
    %v251 = vpack.c.b16 %v210, %v209
    %v252 = vpack.c.b16 %v212, %v211
    %v253 = vpack.c.b16 %v214, %v213
    %v254 = vpack.c.b16 %v216, %v215
    %v255 = vpack.c.b16 %v218, %v217
    %v256 = vpack.c.b16 %v220, %v219
    %v257 = vpack.c.b16 %v222, %v221
    %v258 = vpack.c.b16 %v224, %v223
    %v259 = vpack.c.b16 %v226, %v225
    %v260 = vpack.c.b16 %v228, %v227
    %v261 = vpack.c.b16 %v230, %v229
    %v262 = vpack.c.b16 %v232, %v231
    %v263 = vpack.c.b16 %v234, %v233
    %v264 = vpack.c.b16 %v236, %v235
    %v265 = vpack.c.b16 %v238, %v237
    %v266 = vpack.c.b16 %v240, %v239
    %v267 = vpack.c.b16 %v242, %v241
    %v268 = vpack.c.b16 %v244, %v243
    %293 = vmatpush.bf16.msra.mxu0 %v252
    %294 = vmatpush.bf16.msra.mxu0 %v251
    %295 = vmatpush.bf16.msra.mxu0 %v250
    %296 = vmatpush.bf16.msra.mxu0 %v249
    %297 = vmatpush.bf16.msra.mxu0 %v248
    %298 = vmatpush.bf16.msra.mxu0 %v247
    %299 = vmatpush.bf16.msra.mxu0 %v246
    %300 = vmatpush.bf16.msra.mxu0 %v245
    %301 = vmatmul.bf16.gmra.mxu0 %v91
    %v302 = vpop.f32.mrf.mxu0
    %v303 = vadd.f32 %v147, %v302
    %v304 = vpop.f32.mrf.mxu0
    %v305 = vadd.f32 %v147, %v304
    %306 = vmatmul.bf16.gmra.mxu0 %v94
    %v307 = vpop.f32.mrf.mxu0
    %v308 = vadd.f32 %v147, %v307
    %v309 = vpop.f32.mrf.mxu0
    %v310 = vadd.f32 %v147, %v309
    %311 = vdwg.mxu0
    %312 = vmatpush.bf16.msra.mxu0 %v260
    %313 = vmatpush.bf16.msra.mxu0 %v259
    %314 = vmatpush.bf16.msra.mxu0 %v258
    %315 = vmatpush.bf16.msra.mxu0 %v257
    %316 = vmatpush.bf16.msra.mxu0 %v256
    %317 = vmatpush.bf16.msra.mxu0 %v255
    %318 = vmatpush.bf16.msra.mxu0 %v254
    %319 = vmatpush.bf16.msra.mxu0 %v253
    %320 = vmatmul.bf16.gmra.mxu0 %v92
    %v321 = vpop.f32.mrf.mxu0
    %v322 = vadd.f32 %v303, %v321
    %v323 = vpop.f32.mrf.mxu0
    %v324 = vadd.f32 %v305, %v323
    %325 = vmatmul.bf16.gmra.mxu0 %v95
    %v326 = vpop.f32.mrf.mxu0
    %v327 = vadd.f32 %v308, %v326
    %v328 = vpop.f32.mrf.mxu0
    %v329 = vadd.f32 %v310, %v328
    %330 = vdwg.mxu0
    %331 = vmatpush.bf16.msra.mxu0 %v268
    %332 = vmatpush.bf16.msra.mxu0 %v267
    %333 = vmatpush.bf16.msra.mxu0 %v266
    %334 = vmatpush.bf16.msra.mxu0 %v265
    %335 = vmatpush.bf16.msra.mxu0 %v264
    %336 = vmatpush.bf16.msra.mxu0 %v263
    %337 = vmatpush.bf16.msra.mxu0 %v262
    %338 = vmatpush.bf16.msra.mxu0 %v261
    %339 = vmatmul.bf16.gmra.mxu0 %v93
    %v340 = vpop.f32.mrf.mxu0
    %v341 = vadd.f32 %v322, %v340
    %v342 = vpop.f32.mrf.mxu0
    %v343 = vadd.f32 %v324, %v342
    %344 = vmatmul.bf16.gmra.mxu0 %v96
    %v345 = vpop.f32.mrf.mxu0
    %v346 = vadd.f32 %v327, %v345
    %v347 = vpop.f32.mrf.mxu0
    %v348 = vadd.f32 %v329, %v347
    %349 = vdwg.mxu0
    %v350 = vmax.f32 %v341, 0.0
    %v351 = vmax.f32 %v343, 0.0
    %v352 = vmax.f32 %v346, 0.0
    %v353 = vmax.f32 %v348, 0.0
    %v354 = vld [vmem:[%s4] sm:$0x3]
    %vm355 = vcmask 261120
    %v357 = vsel %vm355, %v354, 0
    %359 = vmatpush.msra.mxu0 0.0
    %360 = vmatpush.msra.mxu0 0.0
    %361 = vmatpush.msra.mxu0 0.0
    %362 = vmatpush.msra.mxu0 0.0
    %363 = vmatpush.msra.mxu0 0.0
    %364 = vmatpush.msra.mxu0 0.0
    %365 = vmatpush.msra.mxu0 0.0
    %366 = vmatpush.msra.mxu0 0.0
    %367 = vmatpush.msra.mxu0 0.0
    %368 = vmatpush.msra.mxu0 0.0
    %369 = vmatpush.msra.mxu0 0.0
    %370 = vmatpush.msra.mxu0 0.0
    %371 = vmatpush.msra.mxu0 %v353
    %372 = vmatpush.msra.mxu0 %v352
    %373 = vmatpush.msra.mxu0 %v351
    %374 = vmatpush.msra.mxu0 %v350
    %375 = vmatmul.f32.gmra.mxu0 %v357
    %v376 = vpop.f32.mrf.mxu0
    %v377 = vadd.f32 0.0, %v376
    %378 = vdwg.mxu0
    %v379 = vld [vmem:[%s5] sm:$0xff]
    %v380 = vld [vmem:[%s5 + $0x8] sm:$0xff]
    %v381 = vld [vmem:[%s5 + $0x10] sm:$0xff]
    %v382 = vld [vmem:[%s5 + $0x18] sm:$0xff]
    %v383 = vld [vmem:[%s5 + $0x20] sm:$0xff]
    %v384 = vld [vmem:[%s5 + $0x28] sm:$0xff]
    %v385 = vld [vmem:[%s5 + $0x30] sm:$0xff]
    %v386 = vld [vmem:[%s5 + $0x38] sm:$0xff]
    %v387 = vld [vmem:[%s5 + $0x40] sm:$0xff]
    %v388 = vld [vmem:[%s5 + $0x48] sm:$0xff]
    %v389 = vld [vmem:[%s5 + $0x50] sm:$0xff]
    %v390 = vld [vmem:[%s5 + $0x58] sm:$0xff]
    %v391 = vld [vmem:[%s5 + $0x60] sm:$0xff]
    %v392 = vld [vmem:[%s5 + $0x68] sm:$0xff]
    %v393 = vld [vmem:[%s5 + $0x70] sm:$0xff]
    %v394 = vld [vmem:[%s5 + $0x78] sm:$0xff]
    %395 = vmatpush.msra.mxu0 %v394
    %396 = vmatpush.msra.mxu0 %v393
    %397 = vmatpush.msra.mxu0 %v392
    %398 = vmatpush.msra.mxu0 %v391
    %399 = vmatpush.msra.mxu0 %v390
    %400 = vmatpush.msra.mxu0 %v389
    %401 = vmatpush.msra.mxu0 %v388
    %402 = vmatpush.msra.mxu0 %v387
    %403 = vmatpush.msra.mxu0 %v386
    %404 = vmatpush.msra.mxu0 %v385
    %405 = vmatpush.msra.mxu0 %v384
    %406 = vmatpush.msra.mxu0 %v383
    %407 = vmatpush.msra.mxu0 %v382
    %408 = vmatpush.msra.mxu0 %v381
    %409 = vmatpush.msra.mxu0 %v380
    %410 = vmatpush.msra.mxu0 %v379
    %411 = vmatmul.f32.gmra.mxu0 %v377
    %v412 = vpop.f32.mrf.mxu0
    %v413 = vadd.f32 0.0, %v412
    %414 = vdwg.mxu0
    %v415 = vld [vmem:[%s6] sm:$0xff]
    %v416 = vld [vmem:[%s7] sm:$0x1]
    %v418 = vperm.slane %v416, 0
    %vm420 = vcmask 64512
    %v422 = vsel %vm420, %v413, 0
    %424 = vmatpush.msra.mxu0 0.0
    %425 = vmatpush.msra.mxu0 0.0
    %426 = vmatpush.msra.mxu0 0.0
    %427 = vmatpush.msra.mxu0 0.0
    %428 = vmatpush.msra.mxu0 0.0
    %429 = vmatpush.msra.mxu0 0.0
    %430 = vmatpush.msra.mxu0 0.0
    %431 = vmatpush.msra.mxu0 0.0
    %432 = vmatpush.msra.mxu0 0.0
    %433 = vmatpush.msra.mxu0 0.0
    %434 = vmatpush.msra.mxu0 0.0
    %435 = vmatpush.msra.mxu0 0.0
    %436 = vmatpush.msra.mxu0 0.0
    %437 = vmatpush.msra.mxu0 0.0
    %438 = vmatpush.msra.mxu0 0.0
    %439 = vmatpush.msra.mxu0 %v415
    %440 = vmatmul.f32.gmra.mxu0 %v422
    %v441 = vpop.f32.mrf.mxu0
    %v442 = vadd.f32 %v418, %v441
    %443 = vdwg.mxu0
    %444 = vst [vmem:[#allocation6] sm:$0x3] %v442
    %vm445 = vcmask 58368
    %446 = vst.msk [vmem:[#allocation7] sm:$0x3] %vm445, %v413
    // Predicated region
    $region38: #{tpu_custom_call.1} parent=1 // pred_check
      _
    $region39: #{tpu_custom_call.1} parent=1 // pred_check_branch
      %448 = sbr.rel (0) target = $region41
    $region40: #{tpu_custom_call.1} parent=1 // pred_region
      %450 = vsyncadd [#allocation5], 0
      %s452 = sshll.u32 [#allocation6], 4
      %s453 = int_to_ptr.vmem [resolvable:$true] %s452
      %s454 = sshll.u32 %s8, 4
      %s455 = int_to_ptr.hbm [resolvable:$true] %s454
      %457 = dma.vmem_to_hbm [thread:$0]  %s453, 32, %s455, [#allocation5]
    $region41: #{tpu_custom_call.1} parent=1 // pred_fallthru
      _
    // Predicated region
    $region42: #{tpu_custom_call.1} parent=1 // pred_check
      _
    $region43: #{tpu_custom_call.1} parent=1 // pred_check_branch
      %459 = sbr.rel (0) target = $region45
    $region44: #{tpu_custom_call.1} parent=1 // pred_region
      %461 = vsyncadd [#allocation8], 0
      %s463 = sshll.u32 [#allocation7], 4
      %s464 = int_to_ptr.vmem [resolvable:$true] %s463
      %s465 = sshll.u32 %s9, 4
      %s466 = int_to_ptr.hbm [resolvable:$true] %s465
      %468 = dma.vmem_to_hbm [thread:$0]  %s464, 32, %s466, [#allocation8]
    $region45: #{tpu_custom_call.1} parent=1 // pred_fallthru
      _
    // Predicated region
    $region46: #{tpu_custom_call.1} parent=1 // pred_check
      _
    $region47: #{tpu_custom_call.1} parent=1 // pred_check_branch
      %470 = sbr.rel (0) target = $region49
    $region48: #{tpu_custom_call.1} parent=1 // pred_region
      %472 = dma.done [#allocation5], 32
    $region49: #{tpu_custom_call.1} parent=1 // pred_fallthru
      _
    // Predicated region
    $region50: #{tpu_custom_call.1} parent=1 // pred_check
      _
    $region51: #{tpu_custom_call.1} parent=1 // pred_check_branch
      %474 = sbr.rel (0) target = $region53
    $region52: #{tpu_custom_call.1} parent=1 // pred_region
      %476 = dma.done [#allocation8], 32
    $region53: #{tpu_custom_call.1} parent=1 // pred_fallthru
      _
    %477 = vsyncpa [#allocation4], 1
    %478 = vsyncpa [#allocation5], 1
    %479 = vsyncpa [#allocation8], 1

</llo_original>
